<compile_context>
chip_gen: v7x
topology: tpu7x:2x2x1
jax: 0.10.0
libtpu: 0.0.40
codegen_flags: <defaults>
</compile_context>

<pallas_src>
import jax
import jax.numpy as jnp
from jax.experimental import pallas as pl
from jax.experimental.pallas import tpu as pltpu


def _pivot_pool_kernel(nblk_ref, plen_ref, h_ref, o_ref, acc_ref):
    # nblk_ref: SMEM int32[nB]         -- # of S blocks holding pivot tokens per batch tile
    # plen_ref: VMEM int32[BB, 1]      -- clamped pivot lengths for this batch tile
    # h_ref:    VMEM dtype[BB, tS, H]  -- hidden-state tile
    # o_ref:    VMEM dtype[BB, H]      -- pooled output tile
    # acc_ref:  VMEM f32[BB, H]        -- running masked sum (persists over k)
    i = pl.program_id(0)
    k = pl.program_id(1)
    BB, tS, _ = h_ref.shape

    @pl.when(k == 0)
    def _init():
        acc_ref[...] = jnp.zeros_like(acc_ref)

    # Skip VPU/XLU work for S blocks past the last pivot token of this batch
    # tile (the index_map already avoids re-DMAing those blocks).
    @pl.when(k < nblk_ref[i])
    def _accumulate():
        plen = plen_ref[...]                                        # (BB, 1) int32
        pos = k * tS + jax.lax.broadcasted_iota(jnp.int32, (BB, tS, 1), 1)
        # Tokens [1 : plen + 1]  ->  1 <= pos <= plen.
        mask = ((pos >= 1) & (pos <= plen[:, :, None])).astype(jnp.float32)
        x = h_ref[...].astype(jnp.float32)                          # f32 accumulate
        acc_ref[...] += jnp.sum(x * mask, axis=1)                   # (BB, H)

    @pl.when(k == pl.num_programs(1) - 1)
    def _finalize():
        inv_len = pl.reciprocal(plen_ref[...].astype(jnp.float32), approx=True)
        o_ref[...] = (acc_ref[...] * inv_len).astype(o_ref.dtype)


def pivot_entity_pooler(hidden_states, pivot_len_list, *,
                        block_b=None, block_s=None,
                        vmem_target_bytes=8 * 1024 * 1024):
    """hidden_states: [B, S, H]; pivot_len_list: int[B] -> [B, H]."""
    B, S, H = hidden_states.shape
    dtype = hidden_states.dtype
    itemsize = jnp.dtype(dtype).itemsize

    # ---- batch tile (sublane-aligned output slab) ----
    sublane = 8 * max(1, 4 // max(1, itemsize))      # 8 for f32, 16 for bf16
    if block_b is not None:
        BB = int(block_b)
    else:
        BB = sublane if B >= sublane else B
    nB = -(-B // BB)
    B_pad = nB * BB

    # ---- sequence tile (bounded VMEM per block) ----
    if block_s is not None:
        tS = min(int(block_s), S)
    else:
        tS = vmem_target_bytes // max(1, BB * H * itemsize)
        tS = min(int(tS), 2048)
    if tS < S:
        tS = max(8, (tS // 8) * 8)                   # (8,128) rule on sublane dim
    else:
        tS = S
    nS = -(-S // tS)
    S_pad = nS * tS

    # Effective lengths: PyTorch slicing [1 : plen+1] silently clips at S-1,
    # and the mean divides by the actual (clipped) slice length.
    eff_len = jnp.minimum(pivot_len_list.astype(jnp.int32), S - 1)
    eff_len = jnp.pad(eff_len, (0, B_pad - B), constant_values=1)

    # Number of S blocks that actually contain pivot tokens, per batch tile.
    tile_max = jnp.max(eff_len.reshape(nB, BB), axis=1)
    nblk = jnp.minimum(tile_max // tS + 1, nS).astype(jnp.int32)     # (nB,)

    h = hidden_states
    if B_pad != B or S_pad != S:
        h = jnp.pad(h, ((0, B_pad - B), (0, S_pad - S), (0, 0)))

    plen2d = eff_len.reshape(B_pad, 1)

    # ---- VMEM budget hint (double-buffered hidden block dominates) ----
    blk_bytes = BB * tS * H * itemsize
    vmem_need = (2 * blk_bytes + 2 * BB * H * itemsize + BB * H * 4
                 + 2 * BB * 4 + (2 << 20))
    vmem_limit = int(min(max(vmem_need, 32 * 1024 * 1024), 64 * 1024 * 1024))

    grid_spec = pltpu.PrefetchScalarGridSpec(
        num_scalar_prefetch=1,            # nblk -> SMEM, visible to index_maps
        grid=(nB, nS),
        in_specs=[
            # pivot lengths: constant across k -> DMA'd once per batch tile
            pl.BlockSpec((BB, 1), lambda i, k, nblk_ref: (i, 0)),
            # hidden states: clamp S block index so blocks past the last
            # pivot token are never (re-)fetched from HBM
            pl.BlockSpec(
                (BB, tS, H),
                lambda i, k, nblk_ref: (i, jnp.minimum(k, nblk_ref[i] - 1), 0)),
        ],
        out_specs=pl.BlockSpec((BB, H), lambda i, k, nblk_ref: (i, 0)),
        scratch_shapes=[pltpu.VMEM((BB, H), jnp.float32)],
    )

    out = pl.pallas_call(
        _pivot_pool_kernel,
        out_shape=jax.ShapeDtypeStruct((B_pad, H), dtype),
        grid_spec=grid_spec,
        compiler_params=pltpu.CompilerParams(
            dimension_semantics=("parallel", "arbitrary"),
            vmem_limit_bytes=vmem_limit,
        ),
    )(nblk, plen2d, h)

    return out[:B]


def _reference(hidden_states, pivot_len_list):
    # Pure-JAX reference mirroring the PyTorch loop.
    outs = []
    for i in range(hidden_states.shape[0]):
        L = int(pivot_len_list[i])
        outs.append(jnp.mean(hidden_states[i, 1:L + 1], axis=0, keepdims=True))
    return jnp.concatenate(outs, axis=0)


if __name__ == "__main__":
    key = jax.random.PRNGKey(0)
    k1, k2, k3, k4 = jax.random.split(key, 4)

    # Case 1: shapes implied by the original module (single tile path).
    B, S, H = 2, 8, 32
    hidden_states = jax.random.normal(k1, (B, S, H), dtype=jnp.float32)
    pivot_len_list = jax.random.randint(k2, (B,), 1, S, dtype=jnp.int32)

    out = jax.block_until_ready(pivot_entity_pooler(hidden_states, pivot_len_list))
    ref = _reference(hidden_states, pivot_len_list)
    assert out.shape == (B, H)
    # tolerance accounts for the EUP approximate reciprocal in the final divide
    assert jnp.allclose(out, ref, atol=1e-4, rtol=5e-3), "case 1 mismatch vs reference"

    # Case 2: exercises batch tiling (nB=2), sequence tiling (nS=4), the f32
    # accumulator, and the pivot-length DMA-skip path.
    B2, S2, H2 = 16, 32, 128
    hidden2 = jax.random.normal(k3, (B2, S2, H2), dtype=jnp.float32)
    plen2 = jax.random.randint(k4, (B2,), 1, S2, dtype=jnp.int32)
    out2 = jax.block_until_ready(pivot_entity_pooler(hidden2, plen2, block_s=8))
    ref2 = _reference(hidden2, plen2)
    assert out2.shape == (B2, H2)
    assert jnp.allclose(out2, ref2, atol=1e-4, rtol=5e-3), "case 2 mismatch vs reference"

    print("KERNEL_OK")
</pallas_src>

<mosaic_0001>
module attributes {stable_mosaic.version = 11 : i64} {
  func.func @_pivot_pool_kernel(%arg0: i32, %arg1: i32, %arg2: memref<1xi32, #tpu.memory_space<smem>>, %arg3: memref<2x1xi32, #tpu.memory_space<vmem>>, %arg4: memref<2x8x32xf32, #tpu.memory_space<vmem>>, %arg5: memref<2x32xf32, #tpu.memory_space<vmem>>, %arg6: memref<2x32xf32, #tpu.memory_space<vmem>>) attributes {dimension_semantics = [#tpu.dimension_semantics<parallel>, #tpu.dimension_semantics<arbitrary>], iteration_bounds = array<i64: 1, 1>, scalar_prefetch = 1 : i64, scratch_operands = 1 : i64, tpu.core_type = #tpu.core_type<tc>, window_params = [{transform_indices = @transform_0, window_bounds = array<i64: 2, 1>}, {transform_indices = @transform_1, window_bounds = array<i64: 2, 8, 32>}, {transform_indices = @transform_2, window_bounds = array<i64: 2, 32>}]} {
    %c0_i32 = arith.constant 0 : i32
    %0 = arith.cmpi eq, %arg1, %c0_i32 : i32
    %1 = arith.extui %0 : i1 to i32
    %c0_i32_0 = arith.constant 0 : i32
    %2 = arith.cmpi ne, %1, %c0_i32_0 : i32
    scf.if %2 {
      %cst = arith.constant 0.000000e+00 : f32
      %11 = vector.broadcast %cst : f32 to vector<2x32xf32>
      %c0 = arith.constant 0 : index
      %c0_4 = arith.constant 0 : index
      %12 = vector.load %arg6[%c0, %c0_4] : memref<2x32xf32, #tpu.memory_space<vmem>>, vector<2x32xf32>
      tpu.vector_store %arg6[%c0, %c0_4], %11 {strides = array<i32>} : memref<2x32xf32, #tpu.memory_space<vmem>>, vector<2x32xf32>,
    } else {
    }
    %3 = arith.index_cast %arg0 : i32 to index
    %4 = memref.load %arg2[%3] : memref<1xi32, #tpu.memory_space<smem>>
    %5 = arith.cmpi slt, %arg1, %4 : i32
    %6 = arith.extui %5 : i1 to i32
    %c0_i32_1 = arith.constant 0 : i32
    %7 = arith.cmpi ne, %6, %c0_i32_1 : i32
    scf.if %7 {
      %c0 = arith.constant 0 : index
      %c0_4 = arith.constant 0 : index
      %11 = vector.load %arg3[%c0, %c0_4] : memref<2x1xi32, #tpu.memory_space<vmem>>, vector<2x1xi32>
      %c8_i32 = arith.constant 8 : i32
      %12 = arith.muli %arg1, %c8_i32 : i32
      %13 = tpu.iota {dimensions = array<i32: 1>} : vector<2x8x1xi32>
      %14 = vector.broadcast %12 : i32 to vector<2x8x1xi32>
      %15 = arith.addi %14, %13 : vector<2x8x1xi32>
      %c1_i32 = arith.constant 1 : i32
      %16 = vector.broadcast %c1_i32 : i32 to vector<2x8x1xi32>
      %17 = arith.cmpi sge, %15, %16 : vector<2x8x1xi32>
      %18 = vector.shape_cast %11 : vector<2x1xi32> to vector<2x1x1xi32>
      %19 = vector.broadcast %18 : vector<2x1x1xi32> to vector<2x8x1xi32>
      %20 = arith.cmpi sle, %15, %19 : vector<2x8x1xi32>
      %21 = arith.andi %17, %20 : vector<2x8x1xi1>
      %22 = arith.extui %21 : vector<2x8x1xi1> to vector<2x8x1xi32>
      %23 = arith.sitofp %22 : vector<2x8x1xi32> to vector<2x8x1xf32>
      %c0_5 = arith.constant 0 : index
      %c0_6 = arith.constant 0 : index
      %c0_7 = arith.constant 0 : index
      %24 = vector.load %arg4[%c0_5, %c0_6, %c0_7] : memref<2x8x32xf32, #tpu.memory_space<vmem>>, vector<2x8x32xf32>
      %c0_8 = arith.constant 0 : index
      %c0_9 = arith.constant 0 : index
      %25 = vector.load %arg6[%c0_8, %c0_9] : memref<2x32xf32, #tpu.memory_space<vmem>>, vector<2x32xf32>
      %26 = vector.broadcast %23 : vector<2x8x1xf32> to vector<2x8x32xf32>
      %27 = arith.mulf %24, %26 : vector<2x8x32xf32>
      %cst = arith.constant dense<0.000000e+00> : vector<2x32xf32>
      %28 = vector.multi_reduction <add>, %27, %cst [1] : vector<2x8x32xf32> to vector<2x32xf32>
      %29 = arith.addf %25, %28 : vector<2x32xf32>
      %c0_10 = arith.constant 0 : index
      %c0_11 = arith.constant 0 : index
      %30 = vector.load %arg6[%c0_10, %c0_11] : memref<2x32xf32, #tpu.memory_space<vmem>>, vector<2x32xf32>
      tpu.vector_store %arg6[%c0_10, %c0_11], %29 {strides = array<i32>} : memref<2x32xf32, #tpu.memory_space<vmem>>, vector<2x32xf32>,
    } else {
    }
    %c0_i32_2 = arith.constant 0 : i32
    %8 = arith.cmpi eq, %arg1, %c0_i32_2 : i32
    %9 = arith.extui %8 : i1 to i32
    %c0_i32_3 = arith.constant 0 : i32
    %10 = arith.cmpi ne, %9, %c0_i32_3 : i32
    scf.if %10 {
      %c0 = arith.constant 0 : index
      %c0_4 = arith.constant 0 : index
      %11 = vector.load %arg3[%c0, %c0_4] : memref<2x1xi32, #tpu.memory_space<vmem>>, vector<2x1xi32>
      %12 = arith.sitofp %11 : vector<2x1xi32> to vector<2x1xf32>
      %13 = tpu.reciprocal %12 {approx = true} : vector<2x1xf32> -> vector<2x1xf32>
      %c0_5 = arith.constant 0 : index
      %c0_6 = arith.constant 0 : index
      %14 = vector.load %arg6[%c0_5, %c0_6] : memref<2x32xf32, #tpu.memory_space<vmem>>, vector<2x32xf32>
      %15 = vector.broadcast %13 : vector<2x1xf32> to vector<2x32xf32>
      %16 = arith.mulf %14, %15 : vector<2x32xf32>
      %c0_7 = arith.constant 0 : index
      %c0_8 = arith.constant 0 : index
      %17 = vector.load %arg5[%c0_7, %c0_8] : memref<2x32xf32, #tpu.memory_space<vmem>>, vector<2x32xf32>
      tpu.vector_store %arg5[%c0_7, %c0_8], %16 {strides = array<i32>} : memref<2x32xf32, #tpu.memory_space<vmem>>, vector<2x32xf32>,
    } else {
    }
    return
  }
  func.func @transform_0(%arg0: i32, %arg1: i32, %arg2: memref<1xi32, #tpu.memory_space<smem>>) -> (i32, i32) {
    %c0_i32 = arith.constant 0 : i32
    %c0_i32_0 = arith.constant 0 : i32
    return %arg0, %c0_i32 : i32, i32
  }
  func.func @transform_1(%arg0: i32, %arg1: i32, %arg2: memref<1xi32, #tpu.memory_space<smem>>) -> (i32, i32, i32) {
    %0 = arith.index_cast %arg0 : i32 to index
    %1 = memref.load %arg2[%0] : memref<1xi32, #tpu.memory_space<smem>>
    %c1_i32 = arith.constant 1 : i32
    %2 = arith.subi %1, %c1_i32 : i32
    %3 = arith.minsi %arg1, %2 : i32
    %c0_i32 = arith.constant 0 : i32
    %c0_i32_0 = arith.constant 0 : i32
    return %arg0, %3, %c0_i32 : i32, i32, i32
  }
  func.func @transform_2(%arg0: i32, %arg1: i32, %arg2: memref<1xi32, #tpu.memory_space<smem>>) -> (i32, i32) {
    %c0_i32 = arith.constant 0 : i32
    %c0_i32_0 = arith.constant 0 : i32
    return %arg0, %c0_i32 : i32, i32
  }
}

</mosaic_0001>

<llo_original>
// kernel: tpu_custom_call.1
$region0: #{tpu_custom_call.1}
  #allocation0 [shape = 'u32[]', space=smem, size = 0x4, offset = 0x4, fixed_abs, tag = 'smem constant byte address 0x4 - core index']
  #allocation1 [shape = 'u32[144,128]{1,0:T(1,128)}', space=vmem, size = 0x12000, scoped, tag = 'internal scratch']
  #allocation2 [shape = 'f32[2,32]{1,0:T(2,128)}', space=vmem, size = 0x400, scoped, tag = 'scratch operand']
  #allocation3 [shape = 's32[1]{0}', space=sflag, size = 0x4, scoped, tag = 'scoped memory for tpu_custom_call.1']
  #allocation4 [shape = 's32[1]{0:T(128)S(6)}', space=smem, size = 0x200, scoped, tag = 'prefetched SMEM operand 0']
  %s0 = inlined_call_operand.<no memory space> [shape: s32[1], index: 0, kind: input, shape index: {}]
  %s1 = inlined_call_operand.vmem [shape: s32[2,1], index: 1, kind: input, shape index: {}]
  %s2 = inlined_call_operand.hbm [shape: f32[2,8,32], index: 2, kind: input, shape index: {}]
  %s3 = inlined_call_operand.hbm [shape: f32[2,32], index: 3, kind: output, shape index: {}]
  %s4 = sld [smem:[#allocation0]]
  $region34: #{tpu_custom_call.1} parent=0
    _
  %s6 = ssub.s32 1, %s4
  %s7 = scalar_select 0, %s6, %s4
  %8 = sst [smem:[#allocation4]] %s0
  $region1: #{tpu_custom_call.1} parent=0
    #allocation5 [shape = 'u8[8192]{0}', space=vmem, size = 0x2000, scoped, tag = 'input window, operand 2, single buffered']
    #allocation6 [shape = 's32[1]{0}', space=sflag, size = 0x4, scoped, tag = 'scoped memory for tpu_custom_call.1']
    #allocation7 [shape = 's32[1]{0}', space=sflag, size = 0x4, scoped, tag = 'scoped memory for tpu_custom_call.1']
    #allocation8 [shape = 'u8[1024]{0}', space=vmem, size = 0x400, scoped, tag = 'output window, operand 0, single buffered']
    %9 = vsyncpa [#allocation6], 0
    %10 = vsyncpa [#allocation7], 0
    // Predicated region
    $region2: #{tpu_custom_call.1} parent=1 // pred_check
      _
    $region3: #{tpu_custom_call.1} parent=1 // pred_check_branch
      %12 = sbr.rel (0) target = $region5
    $region4: #{tpu_custom_call.1} parent=1 // pred_region
      _
    $region5: #{tpu_custom_call.1} parent=1 // pred_fallthru
      _
    // Predicated region
    $region6: #{tpu_custom_call.1} parent=1 // pred_check
      _
    $region7: #{tpu_custom_call.1} parent=1 // pred_check_branch
      %14 = sbr.rel (0) target = $region9
    $region8: #{tpu_custom_call.1} parent=1 // pred_region
      %s15 = sld [smem:[#allocation4]]
      %s16 = ssub.s32 %s15, 1
      %p17 = scmp.lt.s32.totalorder 0, %s16
      %s18 = scalar_select %p17, 0, %s16
      %s20 = ssub.s32 256, 256
      %21 = vsyncadd [#allocation6], %s20
      %s22 = smul.addr %s18, 128
      %s23 = scalar_lea.hbm %s2, %s22
      %s24 = sshll.u32 [#allocation5], 4
      %s25 = int_to_ptr.vmem [resolvable:$true] %s24
      %30 = dma.hbm_to_vmem [thread:$0]  %s23, 256, %s25, [#allocation6], 128, 128, 8
    $region9: #{tpu_custom_call.1} parent=1 // pred_fallthru
      _
    // Predicated region
    $region10: #{tpu_custom_call.1} parent=1 // pred_check
      _
    $region11: #{tpu_custom_call.1} parent=1 // pred_check_branch
      %32 = sbr.rel (0) target = $region13
    $region12: #{tpu_custom_call.1} parent=1 // pred_region
      %33 = dma.done [#allocation6], 256
    $region13: #{tpu_custom_call.1} parent=1 // pred_fallthru
      _
    %s34 = sld [smem:[#allocation4]]
    %s35 = ssub.s32 %s34, 1
    %p36 = scmp.lt.s32.totalorder 0, %s35
    %s37 = scalar_select %p36, 0, %s35
    %p38 = scmp.eq.s32.totalorder 0, 0
    // Predicated region
    $region14: #{tpu_custom_call.1} parent=1 // pred_check
      %p39 = pneg %p38
    $region15: #{tpu_custom_call.1} parent=1 // pred_check_branch
      %41 = sbr.rel (%p39) target = $region17
    $region16: #{tpu_custom_call.1} parent=1 // pred_region
      %vm42 = vcmask 254976
      %43 = vst.msk [vmem:[#allocation2] sm:$0x3] %vm42, 0.0
    $region17: #{tpu_custom_call.1} parent=1 // pred_fallthru
      _
    %s44 = sld [smem:[#allocation4]]
    %p45 = scmp.lt.s32.totalorder 0, %s44
    // Predicated region
    $region18: #{tpu_custom_call.1} parent=1 // pred_check
      %p46 = pneg %p45
    $region19: #{tpu_custom_call.1} parent=1 // pred_check_branch
      %48 = sbr.rel (%p46) target = $region21
    $region20: #{tpu_custom_call.1} parent=1 // pred_region
      %v49 = vld [vmem:[%s1] sm:$0x3]
      %s50 = smul.u32 0, 8
      %v51 = vlaneseq
      %v52 = vshrl.u32 %v51, 7
      %v53 = vstv %s50
      %v54 = vadd.s32 %v53, %v52
      %vm55 = vcmp.ge.s32.totalorder %v54, 1
      %v57 = vunpack.c.l.s4 1966171168
      %v58 = vunpack.c.0.s8 %v57
      %v59 = vlaneseq
      %v60 = vshrl.u32 %v59, 7
      %v61 = vsub.s32 %v58, %v60
      %v62 = vrot.slane %v49, %v61
      %v63 = vcombine.high %v62, %v62
      %v65 = vunpack.c.l.s4 1966171168
      %v66 = vunpack.c.0.s8 %v65
      %v67 = vlaneseq
      %v68 = vshrl.u32 %v67, 7
      %v69 = vsub.s32 %v66, %v68
      %v70 = vrot.slane %v62, %v69
      %v72 = vunpack.c.l.s4 1966171168
      %v73 = vunpack.c.0.s8 %v72
      %v74 = vlaneseq
      %v75 = vshrl.u32 %v74, 7
      %v76 = vsub.s32 %v73, %v75
      %v77 = vrot.slane %v63, %v76
      %v78 = vlaneseq
      %v79 = vshrl.u32 %v78, 7
      %v80 = vsub.s32 0, %v79
      %v81 = vrot.slane %v70, %v80
      %v82 = vlaneseq
      %v83 = vshrl.u32 %v82, 7
      %v84 = vsub.s32 0, %v83
      %v85 = vrot.slane %v77, %v84
      %vm86 = vcmp.le.s32.totalorder %v54, %v81
      %vm87 = vcmp.le.s32.totalorder %v54, %v85
      %vm88 = vmand %vm55, %vm86
      %vm89 = vmand %vm55, %vm87
      %v90 = vsel %vm88, 1, 0
      %v91 = vsel %vm89, 1, 0
      %v92 = vcvt.s32.f32 %v90
      %v93 = vcvt.s32.f32 %v91
      %v94 = vld [vmem:[#allocation5] sm:$0xff]
      %v95 = vld [vmem:[#allocation5 + $0x8] sm:$0xff]
      %v96 = vld [vmem:[#allocation2] sm:$0x3]
      %98 = vset.pattern.permute.xlu0 0
      %99 = vperm.xlu0 %98, %v92
      %v100 = vpop.permute.xlu0 %99
      %103 = vset.pattern.permute.xlu0 0
      %104 = vperm.xlu0 %103, %v93
      %v105 = vpop.permute.xlu0 %104
      %v107 = vmul.f32 %v94, %v100
      %v108 = vmul.f32 %v95, %v105
      %vm109 = vcmask 261120
      %v110 = vsel %vm109, %v107, 0.0
      %v111 = vrot.slane %v110, 4
      %v112 = vadd.f32 %v110, %v111
      %v113 = vrot.slane %v112, 2
      %v114 = vadd.f32 %v112, %v113
      %v115 = vrot.slane %v114, 1
      %v116 = vadd.f32 %v114, %v115
      %v117 = vsel %vm109, %v108, 0.0
      %v118 = vrot.slane %v117, 4
      %v119 = vadd.f32 %v117, %v118
      %v120 = vrot.slane %v119, 2
      %v121 = vadd.f32 %v119, %v120
      %v122 = vrot.slane %v121, 1
      %v123 = vadd.f32 %v121, %v122
      %vm126 = vcmask 1041409
      %v127 = vsel %vm126, %v123, %v116
      %v129 = vadd.f32 %v96, %v127
      %vm130 = vcmask 254976
      %131 = vst.msk [vmem:[#allocation2] sm:$0x3] %vm130, %v129
    $region21: #{tpu_custom_call.1} parent=1 // pred_fallthru
      _
    // Predicated region
    $region22: #{tpu_custom_call.1} parent=1 // pred_check
      %p132 = pneg %p38
    $region23: #{tpu_custom_call.1} parent=1 // pred_check_branch
      %134 = sbr.rel (%p132) target = $region25
    $region24: #{tpu_custom_call.1} parent=1 // pred_region
      %v135 = vld [vmem:[%s1] sm:$0x3]
      %v136 = vcvt.s32.f32 %v135
      %v137 = vrcp.pop %v136
      %v138 = vld [vmem:[#allocation2] sm:$0x3]
      %140 = vset.pattern.permute.xlu0 0
      %141 = vperm.xlu0 %140, %v137
      %v142 = vpop.permute.xlu0 %141
      %v144 = vmul.f32 %v138, %v142
      %vm145 = vcmask 254976
      %146 = vst.msk [vmem:[#allocation8] sm:$0x3] %vm145, %v144
    $region25: #{tpu_custom_call.1} parent=1 // pred_fallthru
      _
    // Predicated region
    $region26: #{tpu_custom_call.1} parent=1 // pred_check
      _
    $region27: #{tpu_custom_call.1} parent=1 // pred_check_branch
      %148 = sbr.rel (0) target = $region29
    $region28: #{tpu_custom_call.1} parent=1 // pred_region
      %s150 = ssub.s32 32, 32
      %151 = vsyncadd [#allocation7], %s150
      %s153 = sshll.u32 [#allocation8], 4
      %s154 = int_to_ptr.vmem [resolvable:$true] %s153
      %156 = dma.vmem_to_hbm [thread:$0]  %s154, 32, %s3, [#allocation7]
    $region29: #{tpu_custom_call.1} parent=1 // pred_fallthru
      _
    // Predicated region
    $region30: #{tpu_custom_call.1} parent=1 // pred_check
      _
    $region31: #{tpu_custom_call.1} parent=1 // pred_check_branch
      %158 = sbr.rel (0) target = $region33
    $region32: #{tpu_custom_call.1} parent=1 // pred_region
      %159 = dma.done [#allocation7], 32
    $region33: #{tpu_custom_call.1} parent=1 // pred_fallthru
      _
    %160 = vsyncpa [#allocation6], 1
    %161 = vsyncpa [#allocation7], 1

</llo_original>
